<compile_context>
chip_gen: v5e
topology: v5e:2x2
jax: 0.10.0
libtpu: 0.0.40
codegen_flags: <defaults>
</compile_context>

<pallas_src>
import math

import jax
import jax.numpy as jnp
from jax.experimental import pallas as pl
from jax.experimental.pallas import tpu as pltpu


def edge_mlp_kernel(hu_ref, hv_ref, wu_ref, wv_ref, b_ref, out_ref):
    """outT = Wu @ h_uT + Wv @ h_vT + b, lane-dense (edges on lanes)."""
    acc = jnp.dot(wu_ref[...], hu_ref[...], preferred_element_type=jnp.float32)
    acc = acc + jnp.dot(wv_ref[...], hv_ref[...],
                        preferred_element_type=jnp.float32)
    out_ref[...] = (acc + b_ref[...]).astype(out_ref.dtype)


def mlp_predictor(x, edge_index, weight, bias, *, edge_tile=65536):
    """x: [N, F] f32, edge_index: [2, E] int, weight: [C, 2F], bias: [C]."""
    N, F = x.shape
    C, twoF = weight.shape
    assert twoF == 2 * F, "weight must be [out_classes, 2 * in_features]"
    E = edge_index.shape[1]

    # Degenerate case: no edges -> empty result (avoids a zero-size grid).
    if E == 0:
        return jnp.zeros((0, C), dtype=x.dtype)

    src, dst = edge_index[0], edge_index[1]
    itemsize = jnp.dtype(x.dtype).itemsize

    # --- tiling: edges on the lane axis, tile a multiple of 128 ------------
    te = max(128, (int(edge_tile) // 128) * 128)
    # Cap so double-buffered (F,te)+(F,te)+(C,te) tiles fit a 24 MiB budget
    # (leaves headroom inside the 32 MiB scoped VMEM limit on every gen).
    vmem_budget = 24 * 1024 * 1024
    te_cap = max(128, (vmem_budget // ((2 * F + C) * itemsize * 2)) // 128 * 128)
    te = min(te, te_cap)
    # Keep >= 2 grid steps whenever E allows it so the "parallel" edge axis
    # actually shards across v7x's 2 TensorCores (and avoids over-padding
    # tiny E): cap te at round_up(ceil(E/2), 128).
    te = min(te, max(128, ((E + 255) // 256) * 128))

    e_pad = pl.cdiv(E, te) * te
    pad = e_pad - E

    # Pad the ragged tail with node 0 (a valid index); padded lanes are
    # sliced off after the kernel.  NOTE: JAX gathers clamp out-of-range
    # indices (PyTorch would raise), so malformed edge_index is clamped.
    src_p = jnp.pad(src, (0, pad))
    dst_p = jnp.pad(dst, (0, pad))

    # Glue gathers (XLA): row gather (embedding-lookup style, efficient) then
    # transpose into the lane-dense layout the kernel consumes.  No concat.
    h_u_t = jnp.take(x, src_p, axis=0).T          # [F, E_pad]
    h_v_t = jnp.take(x, dst_p, axis=0).T          # [F, E_pad]

    # Static weight split replaces the in-kernel concat.
    wu = weight[:, :F]                            # [C, F]
    wv = weight[:, F:]                            # [C, F]
    b2d = bias.reshape(C, 1)                      # [C, 1]

    grid = (e_pad // te,)
    cost = pl.CostEstimate(
        flops=2 * C * twoF * e_pad,
        transcendentals=0,
        bytes_accessed=(2 * F * e_pad + C * e_pad + 2 * C * F + C) * itemsize,
    )

    out_t = pl.pallas_call(
        edge_mlp_kernel,
        out_shape=jax.ShapeDtypeStruct((C, e_pad), x.dtype),
        grid_spec=pltpu.PrefetchScalarGridSpec(
            num_scalar_prefetch=0,
            grid=grid,
            in_specs=[
                pl.BlockSpec((F, te), lambda i: (0, i)),    # h_uT tile
                pl.BlockSpec((F, te), lambda i: (0, i)),    # h_vT tile
                pl.BlockSpec((C, F), lambda i: (0, 0)),     # Wu (resident)
                pl.BlockSpec((C, F), lambda i: (0, 0)),     # Wv (resident)
                pl.BlockSpec((C, 1), lambda i: (0, 0)),     # bias (resident)
            ],
            out_specs=pl.BlockSpec((C, te), lambda i: (0, i)),  # lane-dense
        ),
        compiler_params=pltpu.CompilerParams(
            # Edge axis is embarrassingly parallel (megacore / v7x 2 TCs).
            dimension_semantics=("parallel",),
            # Tile budget above keeps double-buffered tiles < 24 MiB, so a
            # 32 MiB scoped limit is ample and safe on v5e/v6e (128 MiB phys)
            # and v7x (64 MiB phys).
            vmem_limit_bytes=32 * 1024 * 1024,
        ),
        cost_estimate=cost,
    )(h_u_t, h_v_t, wu, wv, b2d)

    # Module contract is [E, C]; the tiny [C,E]->[E,C] transpose stays in XLA.
    return out_t[:, :E].T


if __name__ == "__main__":
    key = jax.random.PRNGKey(0)
    k_x, k_w, k_b, k_e = jax.random.split(key, 4)

    # Small shapes consistent with the module.
    num_nodes = 10
    in_features = 16
    out_classes = 4
    num_edges = 8

    x = jax.random.normal(k_x, (num_nodes, in_features), dtype=jnp.float32)

    # Deterministic Linear(2F -> C) init (PyTorch-style uniform bound).
    fan_in = 2 * in_features
    bound = 1.0 / math.sqrt(fan_in)
    weight = jax.random.uniform(k_w, (out_classes, fan_in),
                                minval=-bound, maxval=bound,
                                dtype=jnp.float32)
    bias = jax.random.uniform(k_b, (out_classes,),
                              minval=-bound, maxval=bound,
                              dtype=jnp.float32)

    edge_index = jax.random.randint(k_e, (2, num_edges), 0, num_nodes,
                                    dtype=jnp.int32)

    out = mlp_predictor(x, edge_index, weight, bias)
    out = jax.block_until_ready(out)

    # Pure-JAX reference (mirrors the PyTorch forward).
    h_u = x[edge_index[0]]
    h_v = x[edge_index[1]]
    ref = jnp.concatenate([h_u, h_v], axis=1) @ weight.T + bias

    assert out.shape == (num_edges, out_classes)
    assert jnp.allclose(out, ref, atol=1e-4, rtol=1e-4)
    print("KERNEL_OK")
</pallas_src>

<mosaic_0001>
module attributes {stable_mosaic.version = 11 : i64} {
  func.func @edge_mlp_kernel(%arg0: i32, %arg1: memref<16x128xf32, #tpu.memory_space<vmem>>, %arg2: memref<16x128xf32, #tpu.memory_space<vmem>>, %arg3: memref<4x16xf32, #tpu.memory_space<vmem>>, %arg4: memref<4x16xf32, #tpu.memory_space<vmem>>, %arg5: memref<4x1xf32, #tpu.memory_space<vmem>>, %arg6: memref<4x128xf32, #tpu.memory_space<vmem>>) attributes {dimension_semantics = [#tpu.dimension_semantics<parallel>], iteration_bounds = array<i64: 1>, scalar_prefetch = 0 : i64, scratch_operands = 0 : i64, tpu.core_type = #tpu.core_type<tc>, window_params = [{transform_indices = @transform_0, window_bounds = array<i64: 16, 128>}, {transform_indices = @transform_1, window_bounds = array<i64: 16, 128>}, {pipeline_mode = #tpu.pipeline_mode<synchronous>, transform_indices = @transform_2, window_bounds = array<i64: 4, 16>}, {pipeline_mode = #tpu.pipeline_mode<synchronous>, transform_indices = @transform_3, window_bounds = array<i64: 4, 16>}, {pipeline_mode = #tpu.pipeline_mode<synchronous>, transform_indices = @transform_4, window_bounds = array<i64: 4, 1>}, {transform_indices = @transform_5, window_bounds = array<i64: 4, 128>}]} {
    %c0 = arith.constant 0 : index
    %c0_0 = arith.constant 0 : index
    %0 = vector.load %arg3[%c0, %c0_0] : memref<4x16xf32, #tpu.memory_space<vmem>>, vector<4x16xf32>
    %c0_1 = arith.constant 0 : index
    %c0_2 = arith.constant 0 : index
    %1 = vector.load %arg1[%c0_1, %c0_2] : memref<16x128xf32, #tpu.memory_space<vmem>>, vector<16x128xf32>
    %cst = arith.constant dense<0.000000e+00> : vector<4x128xf32>
    %2 = tpu.matmul %0, %1, %cst {dimension_numbers = #tpu.dot_dimension_numbers<[1], [0], [0], [1], [0, 0, 1, 1], [], []>} : vector<4x16xf32>, vector<16x128xf32>, vector<4x128xf32> -> vector<4x128xf32>
    %c0_3 = arith.constant 0 : index
    %c0_4 = arith.constant 0 : index
    %3 = vector.load %arg4[%c0_3, %c0_4] : memref<4x16xf32, #tpu.memory_space<vmem>>, vector<4x16xf32>
    %c0_5 = arith.constant 0 : index
    %c0_6 = arith.constant 0 : index
    %4 = vector.load %arg2[%c0_5, %c0_6] : memref<16x128xf32, #tpu.memory_space<vmem>>, vector<16x128xf32>
    %cst_7 = arith.constant dense<0.000000e+00> : vector<4x128xf32>
    %5 = tpu.matmul %3, %4, %cst_7 {dimension_numbers = #tpu.dot_dimension_numbers<[1], [0], [0], [1], [0, 0, 1, 1], [], []>} : vector<4x16xf32>, vector<16x128xf32>, vector<4x128xf32> -> vector<4x128xf32>
    %6 = arith.addf %2, %5 : vector<4x128xf32>
    %c0_8 = arith.constant 0 : index
    %c0_9 = arith.constant 0 : index
    %7 = vector.load %arg5[%c0_8, %c0_9] : memref<4x1xf32, #tpu.memory_space<vmem>>, vector<4x1xf32>
    %8 = vector.broadcast %7 : vector<4x1xf32> to vector<4x128xf32>
    %9 = arith.addf %6, %8 : vector<4x128xf32>
    %c0_10 = arith.constant 0 : index
    %c0_11 = arith.constant 0 : index
    %10 = vector.load %arg6[%c0_10, %c0_11] : memref<4x128xf32, #tpu.memory_space<vmem>>, vector<4x128xf32>
    tpu.vector_store %arg6[%c0_10, %c0_11], %9 {strides = array<i32>} : memref<4x128xf32, #tpu.memory_space<vmem>>, vector<4x128xf32>,
    return
  }
  func.func @transform_0(%arg0: i32) -> (i32, i32) {
    %c0_i32 = arith.constant 0 : i32
    %c0_i32_0 = arith.constant 0 : i32
    return %c0_i32, %arg0 : i32, i32
  }
  func.func @transform_1(%arg0: i32) -> (i32, i32) {
    %c0_i32 = arith.constant 0 : i32
    %c0_i32_0 = arith.constant 0 : i32
    return %c0_i32, %arg0 : i32, i32
  }
  func.func @transform_2(%arg0: i32) -> (i32, i32) {
    %c0_i32 = arith.constant 0 : i32
    %c0_i32_0 = arith.constant 0 : i32
    %c0_i32_1 = arith.constant 0 : i32
    return %c0_i32, %c0_i32_0 : i32, i32
  }
  func.func @transform_3(%arg0: i32) -> (i32, i32) {
    %c0_i32 = arith.constant 0 : i32
    %c0_i32_0 = arith.constant 0 : i32
    %c0_i32_1 = arith.constant 0 : i32
    return %c0_i32, %c0_i32_0 : i32, i32
  }
  func.func @transform_4(%arg0: i32) -> (i32, i32) {
    %c0_i32 = arith.constant 0 : i32
    %c0_i32_0 = arith.constant 0 : i32
    %c0_i32_1 = arith.constant 0 : i32
    return %c0_i32, %c0_i32_0 : i32, i32
  }
  func.func @transform_5(%arg0: i32) -> (i32, i32) {
    %c0_i32 = arith.constant 0 : i32
    %c0_i32_0 = arith.constant 0 : i32
    return %c0_i32, %arg0 : i32, i32
  }
}

</mosaic_0001>

<llo_original>
// kernel: tpu_custom_call.1
$region0: #{tpu_custom_call.1}
  #allocation0 [shape = 'u32[]', space=smem, size = 0x4, offset = 0x4, fixed_abs, tag = 'smem constant byte address 0x4 - core index']
  #allocation1 [shape = 'u32[72,128]{1,0:T(1,128)}', space=vmem, size = 0x9000, scoped, tag = 'internal scratch']
  %s0 = inlined_call_operand.hbm [shape: f32[16,128], index: 0, kind: input, shape index: {}]
  %s1 = inlined_call_operand.hbm [shape: f32[16,128], index: 1, kind: input, shape index: {}]
  %s2 = inlined_call_operand.vmem [shape: f32[4,16], index: 2, kind: input, shape index: {}]
  %s3 = inlined_call_operand.hbm [shape: f32[4,16], index: 3, kind: input, shape index: {}]
  %s4 = inlined_call_operand.vmem [shape: f32[4,1], index: 4, kind: input, shape index: {}]
  %s5 = inlined_call_operand.hbm [shape: f32[4,128], index: 5, kind: output, shape index: {}]
  %s6 = sld [smem:[#allocation0]]
  $region42: #{tpu_custom_call.1} parent=0
    _
  %s8 = ssub.s32 1, %s6
  %s9 = scalar_select 0, %s8, %s6
  $region1: #{tpu_custom_call.1} parent=0
    #allocation2 [shape = 'u8[8192]{0}', space=vmem, size = 0x2000, scoped, tag = 'input window, operand 0, single buffered']
    #allocation3 [shape = 's32[1]{0}', space=sflag, size = 0x4, scoped, tag = 'scoped memory for tpu_custom_call.1']
    #allocation4 [shape = 's32[1]{0}', space=sflag, size = 0x4, scoped, tag = 'scoped memory for tpu_custom_call.1']
    #allocation5 [shape = 'u8[8192]{0}', space=vmem, size = 0x2000, scoped, tag = 'input window, operand 1, single buffered']
    #allocation6 [shape = 's32[1]{0}', space=sflag, size = 0x4, scoped, tag = 'scoped memory for tpu_custom_call.1']
    #allocation7 [shape = 'u8[2048]{0}', space=vmem, size = 0x800, scoped, tag = 'input window, operand 3, single buffered']
    #allocation8 [shape = 'u8[2048]{0}', space=vmem, size = 0x800, scoped, tag = 'output window, operand 0, single buffered']
    %10 = vsyncpa [#allocation3], 0
    %11 = vsyncpa [#allocation6], 0
    %12 = vsyncpa [#allocation4], 0
    // Predicated region
    $region2: #{tpu_custom_call.1} parent=1 // pred_check
      _
    $region3: #{tpu_custom_call.1} parent=1 // pred_check_branch
      %14 = sbr.rel (0) target = $region5
    $region4: #{tpu_custom_call.1} parent=1 // pred_region
      %16 = vsyncadd [#allocation3], 0
      %s17 = sshll.u32 %s0, 4
      %s18 = int_to_ptr.hbm [resolvable:$true] %s17
      %s19 = sshll.u32 [#allocation2], 4
      %s20 = int_to_ptr.vmem [resolvable:$true] %s19
      %25 = dma.hbm_to_vmem [thread:$0]  %s18, 256, %s20, [#allocation3], 128, 128, 8
    $region5: #{tpu_custom_call.1} parent=1 // pred_fallthru
      _
    // Predicated region
    $region6: #{tpu_custom_call.1} parent=1 // pred_check
      _
    $region7: #{tpu_custom_call.1} parent=1 // pred_check_branch
      %27 = sbr.rel (0) target = $region9
    $region8: #{tpu_custom_call.1} parent=1 // pred_region
      %29 = vsyncadd [#allocation6], 0
      %s30 = sshll.u32 %s1, 4
      %s31 = int_to_ptr.hbm [resolvable:$true] %s30
      %s32 = sshll.u32 [#allocation5], 4
      %s33 = int_to_ptr.vmem [resolvable:$true] %s32
      %38 = dma.hbm_to_vmem [thread:$0]  %s31, 256, %s33, [#allocation6], 128, 128, 8
    $region9: #{tpu_custom_call.1} parent=1 // pred_fallthru
      _
    // Predicated region
    $region10: #{tpu_custom_call.1} parent=1 // pred_check
      _
    $region11: #{tpu_custom_call.1} parent=1 // pred_check_branch
      %40 = sbr.rel (0) target = $region13
    $region12: #{tpu_custom_call.1} parent=1 // pred_region
      _
    $region13: #{tpu_custom_call.1} parent=1 // pred_fallthru
      _
    // Predicated region
    $region14: #{tpu_custom_call.1} parent=1 // pred_check
      _
    $region15: #{tpu_custom_call.1} parent=1 // pred_check_branch
      %42 = sbr.rel (0) target = $region17
    $region16: #{tpu_custom_call.1} parent=1 // pred_region
      %44 = vsyncadd [#allocation6], 0
      %s46 = sshll.u32 %s3, 4
      %s47 = int_to_ptr.hbm [resolvable:$true] %s46
      %s48 = sshll.u32 [#allocation7], 4
      %s49 = int_to_ptr.vmem [resolvable:$true] %s48
      %51 = dma.hbm_to_vmem [thread:$0]  %s47, 64, %s49, [#allocation6]
    $region17: #{tpu_custom_call.1} parent=1 // pred_fallthru
      _
    // Predicated region
    $region18: #{tpu_custom_call.1} parent=1 // pred_check
      _
    $region19: #{tpu_custom_call.1} parent=1 // pred_check_branch
      %53 = sbr.rel (0) target = $region21
    $region20: #{tpu_custom_call.1} parent=1 // pred_region
      _
    $region21: #{tpu_custom_call.1} parent=1 // pred_fallthru
      _
    // Predicated region
    $region22: #{tpu_custom_call.1} parent=1 // pred_check
      _
    $region23: #{tpu_custom_call.1} parent=1 // pred_check_branch
      %55 = sbr.rel (0) target = $region25
    $region24: #{tpu_custom_call.1} parent=1 // pred_region
      %57 = dma.done [#allocation3], 256
    $region25: #{tpu_custom_call.1} parent=1 // pred_fallthru
      _
    // Predicated region
    $region26: #{tpu_custom_call.1} parent=1 // pred_check
      _
    $region27: #{tpu_custom_call.1} parent=1 // pred_check_branch
      %59 = sbr.rel (0) target = $region29
    $region28: #{tpu_custom_call.1} parent=1 // pred_region
      %61 = dma.done [#allocation6], 256
    $region29: #{tpu_custom_call.1} parent=1 // pred_fallthru
      _
    // Predicated region
    $region30: #{tpu_custom_call.1} parent=1 // pred_check
      _
    $region31: #{tpu_custom_call.1} parent=1 // pred_check_branch
      %63 = sbr.rel (0) target = $region33
    $region32: #{tpu_custom_call.1} parent=1 // pred_region
      %65 = dma.done [#allocation6], 64
    $region33: #{tpu_custom_call.1} parent=1 // pred_fallthru
      _
    %v66 = vld [vmem:[%s2] sm:$0xf]
    %v67 = vld [vmem:[#allocation2] sm:$0xff]
    %v68 = vld [vmem:[#allocation2 + $0x8] sm:$0xff]
    %v69 = vld [vmem:[#allocation7] sm:$0xf]
    %v70 = vld [vmem:[#allocation5] sm:$0xff]
    %v71 = vld [vmem:[#allocation5 + $0x8] sm:$0xff]
    %vm72 = vcmask 130048
    %v74 = vsel %vm72, %v69, 0
    %76 = vmatpush.msra.mxu0 0.0
    %77 = vmatpush.msra.mxu0 0.0
    %78 = vmatpush.msra.mxu0 0.0
    %79 = vmatpush.msra.mxu0 0.0
    %80 = vmatpush.msra.mxu0 0.0
    %81 = vmatpush.msra.mxu0 0.0
    %82 = vmatpush.msra.mxu0 0.0
    %83 = vmatpush.msra.mxu0 0.0
    %84 = vmatpush.msra.mxu0 0.0
    %85 = vmatpush.msra.mxu0 0.0
    %86 = vmatpush.msra.mxu0 0.0
    %87 = vmatpush.msra.mxu0 0.0
    %88 = vmatpush.msra.mxu0 0.0
    %89 = vmatpush.msra.mxu0 0.0
    %90 = vmatpush.msra.mxu0 %v71
    %91 = vmatpush.msra.mxu0 %v70
    %92 = vmatmul.f32.gmra.mxu0 %v74
    %v93 = vpop.f32.mrf.mxu0
    %v94 = vadd.f32 0.0, %v93
    %95 = vdwg.mxu0
    %v97 = vsel %vm72, %v66, 0
    %99 = vmatpush.msra.mxu0 0.0
    %100 = vmatpush.msra.mxu0 0.0
    %101 = vmatpush.msra.mxu0 0.0
    %102 = vmatpush.msra.mxu0 0.0
    %103 = vmatpush.msra.mxu0 0.0
    %104 = vmatpush.msra.mxu0 0.0
    %105 = vmatpush.msra.mxu0 0.0
    %106 = vmatpush.msra.mxu0 0.0
    %107 = vmatpush.msra.mxu0 0.0
    %108 = vmatpush.msra.mxu0 0.0
    %109 = vmatpush.msra.mxu0 0.0
    %110 = vmatpush.msra.mxu0 0.0
    %111 = vmatpush.msra.mxu0 0.0
    %112 = vmatpush.msra.mxu0 0.0
    %113 = vmatpush.msra.mxu0 %v68
    %114 = vmatpush.msra.mxu0 %v67
    %115 = vmatmul.f32.gmra.mxu0 %v97
    %v116 = vpop.f32.mrf.mxu0
    %v117 = vadd.f32 %v94, %v116
    %118 = vdwg.mxu0
    %v119 = vld [vmem:[%s4] sm:$0xf]
    %121 = vset.pattern.permute.xlu0 0
    %122 = vperm.xlu0 %121, %v119
    %v123 = vpop.permute.xlu0 %122
    %v125 = vadd.f32 %v117, %v123
    %126 = vst [vmem:[#allocation8] sm:$0xf] %v125
    // Predicated region
    $region34: #{tpu_custom_call.1} parent=1 // pred_check
      _
    $region35: #{tpu_custom_call.1} parent=1 // pred_check_branch
      %128 = sbr.rel (0) target = $region37
    $region36: #{tpu_custom_call.1} parent=1 // pred_region
      %130 = vsyncadd [#allocation4], 0
      %s132 = sshll.u32 [#allocation8], 4
      %s133 = int_to_ptr.vmem [resolvable:$true] %s132
      %s134 = sshll.u32 %s5, 4
      %s135 = int_to_ptr.hbm [resolvable:$true] %s134
      %137 = dma.vmem_to_hbm [thread:$0]  %s133, 64, %s135, [#allocation4]
    $region37: #{tpu_custom_call.1} parent=1 // pred_fallthru
      _
    // Predicated region
    $region38: #{tpu_custom_call.1} parent=1 // pred_check
      _
    $region39: #{tpu_custom_call.1} parent=1 // pred_check_branch
      %139 = sbr.rel (0) target = $region41
    $region40: #{tpu_custom_call.1} parent=1 // pred_region
      %141 = dma.done [#allocation4], 64
    $region41: #{tpu_custom_call.1} parent=1 // pred_fallthru
      _
    %142 = vsyncpa [#allocation3], 1
    %143 = vsyncpa [#allocation6], 1
    %144 = vsyncpa [#allocation4], 1

</llo_original>
